<compile_context>
chip_gen: v5e
topology: v5e:2x2
jax: 0.10.0
libtpu: 0.0.40
codegen_flags: <defaults>
</compile_context>

<pallas_src>
import math
from functools import partial

import jax
import jax.numpy as jnp
from jax.experimental import pallas as pl
from jax.experimental.pallas import tpu as pltpu


def _round_up(x, m):
    return (x + m - 1) // m * m


# --------------------------------------------------------------------------
# Pallas kernel 1: tiled matmul  out = act(A @ B + bias [+ residual])
#   A bf16 (Mp, Kp), B bf16 (Kp, Np), bias f32 (1, Np), residual bf16 (Mp, Np)
#   f32 accumulation in VMEM scratch; output dtype selectable (bf16 for convs).
# --------------------------------------------------------------------------
def _mm_kernel(a_ref, b_ref, bias_ref, o_ref, acc_ref, *, act):
    k = pl.program_id(2)

    @pl.when(k == 0)
    def _():
        acc_ref[...] = jnp.zeros_like(acc_ref)

    acc_ref[...] += jnp.dot(a_ref[...], b_ref[...],
                            preferred_element_type=jnp.float32)

    @pl.when(k == pl.num_programs(2) - 1)
    def _():
        r = acc_ref[...] + bias_ref[...]
        if act == "relu":
            r = jnp.maximum(r, 0.0)
        elif act == "sigmoid":
            r = jax.nn.sigmoid(r)
        o_ref[...] = r.astype(o_ref.dtype)


def _mm_res_kernel(a_ref, b_ref, bias_ref, res_ref, o_ref, acc_ref, *, act):
    k = pl.program_id(2)

    @pl.when(k == 0)
    def _():
        acc_ref[...] = jnp.zeros_like(acc_ref)

    acc_ref[...] += jnp.dot(a_ref[...], b_ref[...],
                            preferred_element_type=jnp.float32)

    @pl.when(k == pl.num_programs(2) - 1)
    def _():
        r = acc_ref[...] + bias_ref[...] + res_ref[...].astype(jnp.float32)
        if act == "relu":
            r = jnp.maximum(r, 0.0)
        elif act == "sigmoid":
            r = jax.nn.sigmoid(r)
        o_ref[...] = r.astype(o_ref.dtype)


@partial(jax.jit, static_argnames=("act", "tm", "tn", "tk", "out_dtype"))
def _matmul_padded(a, b, bias, *, act, tm, tn, tk, out_dtype):
    Mp, Kp = a.shape
    _, Np = b.shape
    # Worst case tm=tn=512, tk=1024, bf16 in / f32 acc, double-buffered: ~7 MiB
    # -> inside every generation's scoped default; vmem_limit_bytes untouched.
    return pl.pallas_call(
        partial(_mm_kernel, act=act),
        out_shape=jax.ShapeDtypeStruct((Mp, Np), out_dtype),
        grid_spec=pltpu.PrefetchScalarGridSpec(
            num_scalar_prefetch=0,
            grid=(Mp // tm, Np // tn, Kp // tk),
            in_specs=[
                pl.BlockSpec((tm, tk), lambda i, j, k: (i, k)),
                pl.BlockSpec((tk, tn), lambda i, j, k: (k, j)),
                pl.BlockSpec((1, tn), lambda i, j, k: (0, j)),
            ],
            out_specs=pl.BlockSpec((tm, tn), lambda i, j, k: (i, j)),
            scratch_shapes=[pltpu.VMEM((tm, tn), jnp.float32)],
        ),
        compiler_params=pltpu.CompilerParams(
            dimension_semantics=("parallel", "parallel", "arbitrary")),
    )(a, b, bias)


@partial(jax.jit, static_argnames=("act", "tm", "tn", "tk", "out_dtype"))
def _matmul_res_padded(a, b, bias, res, *, act, tm, tn, tk, out_dtype):
    Mp, Kp = a.shape
    _, Np = b.shape
    return pl.pallas_call(
        partial(_mm_res_kernel, act=act),
        out_shape=jax.ShapeDtypeStruct((Mp, Np), out_dtype),
        grid_spec=pltpu.PrefetchScalarGridSpec(
            num_scalar_prefetch=0,
            grid=(Mp // tm, Np // tn, Kp // tk),
            in_specs=[
                pl.BlockSpec((tm, tk), lambda i, j, k: (i, k)),
                pl.BlockSpec((tk, tn), lambda i, j, k: (k, j)),
                pl.BlockSpec((1, tn), lambda i, j, k: (0, j)),
                pl.BlockSpec((tm, tn), lambda i, j, k: (i, j)),   # residual
            ],
            out_specs=pl.BlockSpec((tm, tn), lambda i, j, k: (i, j)),
            scratch_shapes=[pltpu.VMEM((tm, tn), jnp.float32)],
        ),
        compiler_params=pltpu.CompilerParams(
            dimension_semantics=("parallel", "parallel", "arbitrary")),
    )(a, b, bias, res)


def _m_bucket(m):
    if m <= 8:
        return 8
    if m <= 64:
        return 64
    if m <= 256:
        return 256
    if m <= 512:
        return 512
    return _round_up(m, 512)


def _pick_tiles(M, Kp, Np):
    Mp = _m_bucket(M)
    tm = min(Mp, 512)
    if Np <= 512:
        tn = Np
    elif Np % 512 == 0:
        tn = 512
    elif Np % 256 == 0:
        tn = 256
    else:
        tn = 128
    if Kp <= 1024:
        tk = Kp                       # single K step
    elif Kp % 512 == 0:
        tk = 512                      # 256-aligned K passes keep the MXU full
    elif Kp % 256 == 0:
        tk = 256
    else:
        tk = 128
    return Mp, tm, tn, tk


def prep_linear(w_kn, bias_n):
    """Pre-pad (K, N -> multiples of 128) and pre-cast weight to bf16."""
    K, N = w_kn.shape
    Kp = _round_up(K, 128)
    Np = _round_up(N, 128)
    w_p = jnp.pad(w_kn.astype(jnp.float32),
                  ((0, Kp - K), (0, Np - N))).astype(jnp.bfloat16)
    b_p = jnp.pad(bias_n.astype(jnp.float32).reshape(1, -1),
                  ((0, 0), (0, Np - N)))
    return {"w": w_p, "bias": b_p, "K": K, "N": N}


def pallas_matmul(a, lin, act="none", residual=None, out_dtype=jnp.float32):
    """a: (M, K); lin: prepped weight -> act(a @ W + b [+ residual])[:M, :N]."""
    M, K = a.shape
    w, bias = lin["w"], lin["bias"]
    Kp, Np = w.shape
    assert K == lin["K"]
    Mp, tm, tn, tk = _pick_tiles(M, Kp, Np)
    a_p = jnp.pad(a, ((0, Mp - M), (0, Kp - K)))
    if a_p.dtype != jnp.bfloat16:
        a_p = a_p.astype(jnp.bfloat16)
    if residual is None:
        out = _matmul_padded(a_p, w, bias, act=act,
                             tm=tm, tn=tn, tk=tk, out_dtype=out_dtype)
    else:
        res_p = jnp.pad(residual, ((0, Mp - M), (0, Np - residual.shape[1])))
        if res_p.dtype != jnp.bfloat16:
            res_p = res_p.astype(jnp.bfloat16)
        out = _matmul_res_padded(a_p, w, bias, res_p, act=act,
                                 tm=tm, tn=tn, tk=tk, out_dtype=out_dtype)
    return out[:M, :lin["N"]]


# --------------------------------------------------------------------------
# Pallas kernel 2: fused 3-layer LSTM, single grid step, in-kernel fori_loop
#   - layer-0 input projection (x@Wih0^T + b0) precomputed for all t (xg)
#   - layers 1/2 use pre-concatenated [Wih|Whh] (2H,4H) bf16 weights
#   - xg + weights fully VMEM-resident; h/c carried in vregs
#   - PyTorch gate order i, f, g, o
# --------------------------------------------------------------------------
def _lstm_seq_kernel(xg_ref, whh0_ref, w1_ref, b1_ref, w2_ref, b2_ref,
                     h_out_ref):
    T, Bp, G = xg_ref.shape
    H = G // 4

    whh0 = whh0_ref[...]
    w1 = w1_ref[...]
    w2 = w2_ref[...]
    b1 = b1_ref[...]
    b2 = b2_ref[...]

    def cell(gates, c):
        i = jax.nn.sigmoid(gates[:, 0 * H:1 * H])
        f = jax.nn.sigmoid(gates[:, 1 * H:2 * H])
        g = jnp.tanh(gates[:, 2 * H:3 * H])
        o = jax.nn.sigmoid(gates[:, 3 * H:4 * H])
        c_new = f * c + i * g
        h_new = o * jnp.tanh(c_new)
        return h_new, c_new

    def body(t, carry):
        h0, c0, h1, c1, h2, c2 = carry
        # layer 0 (input projection + bias precomputed into xg)
        g0 = xg_ref[t] + jnp.dot(h0.astype(jnp.bfloat16), whh0,
                                 preferred_element_type=jnp.float32)
        h0, c0 = cell(g0, c0)
        # layer 1: one (Bp,2H)x(2H,4H) pass on concat([h_lower, h_prev])
        x1 = jnp.concatenate([h0, h1], axis=1).astype(jnp.bfloat16)
        g1 = jnp.dot(x1, w1, preferred_element_type=jnp.float32) + b1
        h1, c1 = cell(g1, c1)
        # layer 2
        x2 = jnp.concatenate([h1, h2], axis=1).astype(jnp.bfloat16)
        g2 = jnp.dot(x2, w2, preferred_element_type=jnp.float32) + b2
        h2, c2 = cell(g2, c2)
        return (h0, c0, h1, c1, h2, c2)

    z = jnp.zeros((Bp, H), jnp.float32)
    carry = jax.lax.fori_loop(0, T, body, (z, z, z, z, z, z))
    h_out_ref[...] = carry[4]           # final h of layer 2


@jax.jit
def lstm_forward(xg, whh0, w1, b1, w2, b2):
    """xg: (T, Bp, 4H) f32 precomputed layer-0 gates; returns final h2 (Bp,H)."""
    T, Bp, G = xg.shape
    H = G // 4
    # Entire sequence + weights live in VMEM (T*Bp*4H f32 is ~T*32 KiB at Bp=8).
    return pl.pallas_call(
        _lstm_seq_kernel,
        out_shape=jax.ShapeDtypeStruct((Bp, H), jnp.float32),
    )(xg, whh0, w1, b1, w2, b2)


# --------------------------------------------------------------------------
# Pallas kernel 3: fused head  sigmoid(relu(concat(ud, ef) @ W1 + b1) @ W2 + b2)
# --------------------------------------------------------------------------
def _head_kernel(ud_ref, ef_ref, w1_ref, b1_ref, w2_ref, b2_ref, o_ref):
    x = jnp.concatenate([ud_ref[...], ef_ref[...]],
                        axis=1).astype(jnp.bfloat16)
    h = jnp.dot(x, w1_ref[...], preferred_element_type=jnp.float32) + b1_ref[...]
    h = jnp.maximum(h, 0.0)
    y = (jnp.dot(h.astype(jnp.bfloat16), w2_ref[...],
                 preferred_element_type=jnp.float32) + b2_ref[...])
    o_ref[...] = jax.nn.sigmoid(y)


@jax.jit
def head_forward(ud, ef, w1, b1, w2, b2):
    Bp = ud.shape[0]
    Np = w2.shape[1]
    return pl.pallas_call(
        _head_kernel,
        out_shape=jax.ShapeDtypeStruct((Bp, Np), jnp.float32),
    )(ud, ef, w1, b1, w2, b2)


# --------------------------------------------------------------------------
# Conv / ResNet-101 built on the Pallas matmul (bf16 NHWC activations)
# --------------------------------------------------------------------------
_BN_FOLD = 1.0 / math.sqrt(1.0 + 1e-5)  # eval-mode BN (gamma=1, beta=0, mean=0, var=1)
# TODO(synk): train-mode BatchNorm (batch statistics) not modeled; eval-mode BN
# with identity running stats is folded into the conv weights.


def conv2d(x, cp, act="none", residual=None, out_dtype=jnp.bfloat16):
    """x: (N, H, W, C) bf16 NHWC. Conv via bf16 im2col + Pallas matmul."""
    # TODO(synk): the k>1 patch gather is materialized in HBM (bf16) rather
    # than fused into the kernel's DMA via a (dy,dx) K sub-axis.
    k, stride, pad = cp["k"], cp["stride"], cp["pad"]
    N, H, W, C = x.shape
    Ho = (H + 2 * pad - k) // stride + 1
    Wo = (W + 2 * pad - k) // stride + 1
    xp = jnp.pad(x, ((0, 0), (pad, pad), (pad, pad), (0, 0))) if pad else x
    if k == 1:
        a = xp[:, ::stride, ::stride, :].reshape(N * Ho * Wo, C)
    else:
        cols = [xp[:, dy:dy + stride * Ho:stride, dx:dx + stride * Wo:stride, :]
                for dy in range(k) for dx in range(k)]
        a = jnp.stack(cols, axis=3).reshape(N * Ho * Wo, k * k * C)
    res2d = None
    if residual is not None:
        res2d = residual.reshape(N * Ho * Wo, residual.shape[-1])
    out = pallas_matmul(a, cp["lin"], act=act, residual=res2d,
                        out_dtype=out_dtype)
    return out.reshape(N, Ho, Wo, cp["lin"]["N"])


def bottleneck_forward(p, x):
    out = conv2d(x, p["c1"], act="relu")
    out = conv2d(out, p["c2"], act="relu")
    if "ds" in p:
        identity = conv2d(x, p["ds"], act="none")
    else:
        identity = x
    # residual add + final ReLU fused into the c3 matmul epilogue
    return conv2d(out, p["c3"], act="relu", residual=identity)


def resnet101_forward(p, x_nhwc):
    x = conv2d(x_nhwc.astype(jnp.bfloat16), p["conv1"], act="relu")
    # maxpool 3x3 / stride 2 / pad 1 (NHWC, bf16)
    x = jax.lax.reduce_window(x, jnp.array(-jnp.inf, dtype=x.dtype),
                              jax.lax.max,
                              (1, 3, 3, 1), (1, 2, 2, 1),
                              ((0, 0), (1, 1), (1, 1), (0, 0)))
    for bp in p["blocks"]:
        x = bottleneck_forward(bp, x)
    x = x.astype(jnp.float32).mean(axis=(1, 2))   # adaptive avgpool -> (N, 2048)
    return pallas_matmul(x, p["fc"], act="none", out_dtype=jnp.float32)


# --------------------------------------------------------------------------
# Deterministic parameter construction (shapes match the PyTorch module).
# All matmul weights are pre-packed / pre-padded / pre-cast to bf16 here.
# --------------------------------------------------------------------------
def make_conv(key, out_c, in_c, k, stride, pad):
    fan_in = in_c * k * k
    w = (jax.random.normal(key, (out_c, in_c, k, k), jnp.float32)
         * math.sqrt(2.0 / fan_in) * _BN_FOLD)
    # im2col K ordering is [kh][kw][c] (matches NHWC patch stacking)
    wmat = w.transpose(2, 3, 1, 0).reshape(k * k * in_c, out_c)
    return {"lin": prep_linear(wmat, jnp.zeros((out_c,), jnp.float32)),
            "k": k, "stride": stride, "pad": pad}


def make_bottleneck_params(key, inplanes, planes, stride):
    k1, k2, k3, k4 = jax.random.split(key, 4)
    p = {"c1": make_conv(k1, planes, inplanes, 1, 1, 0),
         "c2": make_conv(k2, planes, planes, 3, stride, 1),
         "c3": make_conv(k3, planes * 4, planes, 1, 1, 0)}
    if stride != 1 or inplanes != planes * 4:
        p["ds"] = make_conv(k4, planes * 4, inplanes, 1, stride, 0)
    return p


def make_resnet101_params(key, fc_out):
    kconv, kblocks, kfc = jax.random.split(key, 3)
    params = {"conv1": make_conv(kconv, 64, 3, 7, 2, 3)}
    blocks = []
    inplanes = 64
    for planes, n_blocks, stride in [(64, 3, 1), (128, 4, 2), (256, 23, 2), (512, 3, 2)]:
        for i in range(n_blocks):
            kblocks, sk = jax.random.split(kblocks)
            blocks.append(make_bottleneck_params(sk, inplanes, planes,
                                                 stride if i == 0 else 1))
            inplanes = planes * 4
    params["blocks"] = blocks
    fc_w = jax.random.normal(kfc, (fc_out, 2048), jnp.float32) / math.sqrt(2048.0)
    params["fc"] = prep_linear(fc_w.T, jnp.zeros((fc_out,), jnp.float32))
    return params


def make_lstm_params(key, input_size=300, hidden=256, num_layers=3):
    bound = 1.0 / math.sqrt(hidden)
    p = {"hidden": hidden}
    for l in range(num_layers):
        insz = input_size if l == 0 else hidden
        key, k1, k2, k3, k4 = jax.random.split(key, 5)
        wih = jax.random.uniform(k1, (4 * hidden, insz), jnp.float32, -bound, bound)
        whh = jax.random.uniform(k2, (4 * hidden, hidden), jnp.float32, -bound, bound)
        bih = jax.random.uniform(k3, (4 * hidden,), jnp.float32, -bound, bound)
        bhh = jax.random.uniform(k4, (4 * hidden,), jnp.float32, -bound, bound)
        b = bih + bhh
        if l == 0:
            # hoisted input projection: x @ Wih0^T + (bih0 + bhh0)
            p["in_proj"] = prep_linear(wih.T, b)
            p["whh0"] = whh.T.astype(jnp.bfloat16)                 # (H, 4H)
        else:
            # fused [Wih | Whh]^T -> (2H, 4H) bf16 for a single MXU pass
            p[f"w{l}"] = jnp.concatenate([wih.T, whh.T],
                                         axis=0).astype(jnp.bfloat16)
            p[f"b{l}"] = b.reshape(1, -1).astype(jnp.float32)
    return p


def make_params(key, num_classes=1):
    k_ud, k_e, k_lstm, k_fc1, k_fc2 = jax.random.split(key, 5)
    fc1_w = jax.random.normal(k_fc1, (128, 512), jnp.float32) / math.sqrt(512.0)
    fc2_w = jax.random.normal(k_fc2, (num_classes, 128), jnp.float32) / math.sqrt(128.0)
    return {
        "ud_resnet": make_resnet101_params(k_ud, 300),   # CNNLSTM: resnet fc -> 300
        "e_resnet": make_resnet101_params(k_e, 256),     # Resnet_E: resnet fc -> 256
        "lstm": make_lstm_params(k_lstm),
        "fc1": prep_linear(fc1_w.T, jnp.zeros((128,), jnp.float32)),
        "fc2": prep_linear(fc2_w.T, jnp.zeros((num_classes,), jnp.float32)),
    }


# --------------------------------------------------------------------------
# CNNLSTMUDE forward
# --------------------------------------------------------------------------
def cnnlstmude_forward(params, x, e):
    B, T, C, H, W = x.shape
    Hh = params["lstm"]["hidden"]

    # UD path: per-frame ResNet-101 features (300-d), then 3-layer LSTM over T
    x_nhwc = x.reshape(B * T, C, H, W).transpose(0, 2, 3, 1)
    feats = resnet101_forward(params["ud_resnet"], x_nhwc)            # (B*T, 300)

    # hoisted layer-0 input projection for all timesteps (bias included)
    xg = pallas_matmul(feats, params["lstm"]["in_proj"], act="none")  # (B*T, 4H)
    xg = xg.reshape(B, T, 4 * Hh).transpose(1, 0, 2)                  # (T, B, 4H)
    Bp = _round_up(B, 8)                                              # sublane pad
    xg = jnp.pad(xg, ((0, 0), (0, Bp - B), (0, 0)))

    hT = lstm_forward(xg,
                      params["lstm"]["whh0"],
                      params["lstm"]["w1"], params["lstm"]["b1"],
                      params["lstm"]["w2"], params["lstm"]["b2"])     # (Bp, 256)

    # E path: ResNet-101 -> 256-d
    ef = resnet101_forward(params["e_resnet"], e.transpose(0, 2, 3, 1))  # (B, 256)
    ef_p = jnp.pad(ef, ((0, Bp - B), (0, 0)))

    # fused head: concat -> fc1 -> relu -> fc2 -> sigmoid in one pallas_call
    # TODO(synk): num_classes > 1 (softmax head) not implemented; sigmoid only.
    out = head_forward(hT, ef_p,
                       params["fc1"]["w"], params["fc1"]["bias"],
                       params["fc2"]["w"], params["fc2"]["bias"])
    return out[:B, :params["fc2"]["N"]]          # (B, num_classes=1), sigmoid


if __name__ == "__main__":
    key = jax.random.PRNGKey(0)
    kp, kx, ke = jax.random.split(key, 3)
    B, T, C, H, W = 2, 2, 3, 16, 16
    x = jax.random.normal(kx, (B, T, C, H, W), jnp.float32)   # video clip
    e = jax.random.normal(ke, (B, C, H, W), jnp.float32)      # single image
    params = make_params(kp, num_classes=1)

    out = cnnlstmude_forward(params, x, e)
    out = jax.block_until_ready(out)
    assert out.shape == (B, 1)
    assert bool(jnp.all(jnp.isfinite(out))) and bool(jnp.all((out >= 0.0) & (out <= 1.0)))
    print("KERNEL_OK")
</pallas_src>

<mosaic_0001>
module attributes {stable_mosaic.version = 11 : i64} {
  func.func @_mm_kernel(%arg0: i32, %arg1: i32, %arg2: i32, %arg3: memref<256x256xbf16, #tpu.memory_space<vmem>>, %arg4: memref<256x128xbf16, #tpu.memory_space<vmem>>, %arg5: memref<1x128xf32, #tpu.memory_space<vmem>>, %arg6: memref<256x128xbf16, #tpu.memory_space<vmem>>, %arg7: memref<256x128xf32, #tpu.memory_space<vmem>>) attributes {dimension_semantics = [#tpu.dimension_semantics<parallel>, #tpu.dimension_semantics<parallel>, #tpu.dimension_semantics<arbitrary>], iteration_bounds = array<i64: 1, 1, 1>, scalar_prefetch = 0 : i64, scratch_operands = 1 : i64, tpu.core_type = #tpu.core_type<tc>, window_params = [{transform_indices = @transform_0, window_bounds = array<i64: 256, 256>}, {transform_indices = @transform_1, window_bounds = array<i64: 256, 128>}, {transform_indices = @transform_2, window_bounds = array<i64: 1, 128>}, {transform_indices = @transform_3, window_bounds = array<i64: 256, 128>}]} {
    %c0_i32 = arith.constant 0 : i32
    %0 = arith.cmpi eq, %arg2, %c0_i32 : i32
    %1 = arith.extui %0 : i1 to i32
    %c0_i32_0 = arith.constant 0 : i32
    %2 = arith.cmpi ne, %1, %c0_i32_0 : i32
    scf.if %2 {
      %cst_10 = arith.constant 0.000000e+00 : f32
      %12 = vector.broadcast %cst_10 : f32 to vector<256x128xf32>
      %c0_11 = arith.constant 0 : index
      %c0_12 = arith.constant 0 : index
      %13 = vector.load %arg7[%c0_11, %c0_12] : memref<256x128xf32, #tpu.memory_space<vmem>>, vector<256x128xf32>
      tpu.vector_store %arg7[%c0_11, %c0_12], %12 {strides = array<i32>} : memref<256x128xf32, #tpu.memory_space<vmem>>, vector<256x128xf32>,
    } else {
    }
    %c0 = arith.constant 0 : index
    %c0_1 = arith.constant 0 : index
    %3 = vector.load %arg7[%c0, %c0_1] : memref<256x128xf32, #tpu.memory_space<vmem>>, vector<256x128xf32>
    %c0_2 = arith.constant 0 : index
    %c0_3 = arith.constant 0 : index
    %4 = vector.load %arg3[%c0_2, %c0_3] : memref<256x256xbf16, #tpu.memory_space<vmem>>, vector<256x256xbf16>
    %c0_4 = arith.constant 0 : index
    %c0_5 = arith.constant 0 : index
    %5 = vector.load %arg4[%c0_4, %c0_5] : memref<256x128xbf16, #tpu.memory_space<vmem>>, vector<256x128xbf16>
    %cst = arith.constant dense<0.000000e+00> : vector<256x128xf32>
    %6 = tpu.matmul %4, %5, %cst {dimension_numbers = #tpu.dot_dimension_numbers<[1], [0], [0], [1], [0, 0, 1, 1], [], []>} : vector<256x256xbf16>, vector<256x128xbf16>, vector<256x128xf32> -> vector<256x128xf32>
    %7 = arith.addf %3, %6 : vector<256x128xf32>
    %c0_6 = arith.constant 0 : index
    %c0_7 = arith.constant 0 : index
    %8 = vector.load %arg7[%c0_6, %c0_7] : memref<256x128xf32, #tpu.memory_space<vmem>>, vector<256x128xf32>
    tpu.vector_store %arg7[%c0_6, %c0_7], %7 {strides = array<i32>} : memref<256x128xf32, #tpu.memory_space<vmem>>, vector<256x128xf32>,
    %c0_i32_8 = arith.constant 0 : i32
    %9 = arith.cmpi eq, %arg2, %c0_i32_8 : i32
    %10 = arith.extui %9 : i1 to i32
    %c0_i32_9 = arith.constant 0 : i32
    %11 = arith.cmpi ne, %10, %c0_i32_9 : i32
    scf.if %11 {
      %c0_10 = arith.constant 0 : index
      %c0_11 = arith.constant 0 : index
      %12 = vector.load %arg7[%c0_10, %c0_11] : memref<256x128xf32, #tpu.memory_space<vmem>>, vector<256x128xf32>
      %c0_12 = arith.constant 0 : index
      %c0_13 = arith.constant 0 : index
      %13 = vector.load %arg5[%c0_12, %c0_13] : memref<1x128xf32, #tpu.memory_space<vmem>>, vector<1x128xf32>
      %14 = vector.broadcast %13 : vector<1x128xf32> to vector<256x128xf32>
      %15 = arith.addf %12, %14 : vector<256x128xf32>
      %cst_14 = arith.constant 0.000000e+00 : f32
      %16 = vector.broadcast %cst_14 : f32 to vector<256x128xf32>
      %17 = arith.maximumf %15, %16 : vector<256x128xf32>
      %18 = arith.truncf %17 : vector<256x128xf32> to vector<256x128xbf16>
      %c0_15 = arith.constant 0 : index
      %c0_16 = arith.constant 0 : index
      %19 = vector.load %arg6[%c0_15, %c0_16] : memref<256x128xbf16, #tpu.memory_space<vmem>>, vector<256x128xbf16>
      tpu.vector_store %arg6[%c0_15, %c0_16], %18 {strides = array<i32>} : memref<256x128xbf16, #tpu.memory_space<vmem>>, vector<256x128xbf16>,
    } else {
    }
    return
  }
  func.func @transform_0(%arg0: i32, %arg1: i32, %arg2: i32) -> (i32, i32) {
    %c0_i32 = arith.constant 0 : i32
    return %arg0, %arg2 : i32, i32
  }
  func.func @transform_1(%arg0: i32, %arg1: i32, %arg2: i32) -> (i32, i32) {
    %c0_i32 = arith.constant 0 : i32
    return %arg2, %arg1 : i32, i32
  }
  func.func @transform_2(%arg0: i32, %arg1: i32, %arg2: i32) -> (i32, i32) {
    %c0_i32 = arith.constant 0 : i32
    %c0_i32_0 = arith.constant 0 : i32
    return %c0_i32, %arg1 : i32, i32
  }
  func.func @transform_3(%arg0: i32, %arg1: i32, %arg2: i32) -> (i32, i32) {
    %c0_i32 = arith.constant 0 : i32
    return %arg0, %arg1 : i32, i32
  }
}

</mosaic_0001>

<llo_original>
// kernel: _matmul_padded.1
$region0: #{_matmul_padded.1}
  #allocation0 [shape = 'u32[]', space=smem, size = 0x4, offset = 0x4, fixed_abs, tag = 'smem constant byte address 0x4 - core index']
  #allocation1 [shape = 'u32[72,128]{1,0:T(1,128)}', space=vmem, size = 0x9000, scoped, tag = 'internal scratch']
  #allocation2 [shape = 'f32[256,128]{1,0:T(8,128)}', space=vmem, size = 0x20000, scoped, tag = 'scratch operand']
  %s0 = inlined_call_operand.hbm [shape: bf16[256,256], index: 0, kind: input, shape index: {}]
  %s1 = inlined_call_operand.hbm [shape: bf16[256,128], index: 1, kind: input, shape index: {}]
  %s2 = inlined_call_operand.vmem [shape: f32[1,128], index: 2, kind: input, shape index: {}]
  %s3 = inlined_call_operand.hbm [shape: bf16[256,128], index: 3, kind: output, shape index: {}]
  %s4 = sld [smem:[#allocation0]]
  $region38: #{_matmul_padded.1} parent=0
    _
  %s6 = ssub.s32 1, %s4
  %s7 = scalar_select 0, %s6, %s4
  $region1: #{_matmul_padded.1} parent=0
    #allocation3 [shape = 'u8[131072]{0}', space=vmem, size = 0x20000, scoped, tag = 'input window, operand 0, single buffered']
    #allocation4 [shape = 's32[1]{0}', space=sflag, size = 0x4, scoped, tag = 'scoped memory for _matmul_padded.1']
    #allocation5 [shape = 's32[1]{0}', space=sflag, size = 0x4, scoped, tag = 'scoped memory for _matmul_padded.1']
    #allocation6 [shape = 'u8[65536]{0}', space=vmem, size = 0x10000, scoped, tag = 'input window, operand 1, single buffered']
    #allocation7 [shape = 's32[1]{0}', space=sflag, size = 0x4, scoped, tag = 'scoped memory for _matmul_padded.1']
    #allocation8 [shape = 'u8[65536]{0}', space=vmem, size = 0x10000, scoped, tag = 'output window, operand 0, single buffered']
    %8 = vsyncpa [#allocation4], 0
    %9 = vsyncpa [#allocation7], 0
    %10 = vsyncpa [#allocation5], 0
    // Predicated region
    $region2: #{_matmul_padded.1} parent=1 // pred_check
      _
    $region3: #{_matmul_padded.1} parent=1 // pred_check_branch
      %12 = sbr.rel (0) target = $region5
    $region4: #{_matmul_padded.1} parent=1 // pred_region
      %14 = vsyncadd [#allocation4], 0
      %s15 = sshll.u32 %s0, 4
      %s16 = int_to_ptr.hbm [resolvable:$true] %s15
      %s17 = sshll.u32 [#allocation3], 4
      %s18 = int_to_ptr.vmem [resolvable:$true] %s17
      %23 = dma.hbm_to_vmem [thread:$0]  %s16, 4096, %s18, [#allocation4], 128, 128, 8
    $region5: #{_matmul_padded.1} parent=1 // pred_fallthru
      _
    // Predicated region
    $region6: #{_matmul_padded.1} parent=1 // pred_check
      _
    $region7: #{_matmul_padded.1} parent=1 // pred_check_branch
      %25 = sbr.rel (0) target = $region9
    $region8: #{_matmul_padded.1} parent=1 // pred_region
      %27 = vsyncadd [#allocation7], 0
      %s28 = sshll.u32 %s1, 4
      %s29 = int_to_ptr.hbm [resolvable:$true] %s28
      %s30 = sshll.u32 [#allocation6], 4
      %s31 = int_to_ptr.vmem [resolvable:$true] %s30
      %36 = dma.hbm_to_vmem [thread:$0]  %s29, 2048, %s31, [#allocation7], 64, 64, 4
    $region9: #{_matmul_padded.1} parent=1 // pred_fallthru
      _
    // Predicated region
    $region10: #{_matmul_padded.1} parent=1 // pred_check
      _
    $region11: #{_matmul_padded.1} parent=1 // pred_check_branch
      %38 = sbr.rel (0) target = $region13
    $region12: #{_matmul_padded.1} parent=1 // pred_region
      _
    $region13: #{_matmul_padded.1} parent=1 // pred_fallthru
      _
    // Predicated region
    $region14: #{_matmul_padded.1} parent=1 // pred_check
      _
    $region15: #{_matmul_padded.1} parent=1 // pred_check_branch
      %40 = sbr.rel (0) target = $region17
    $region16: #{_matmul_padded.1} parent=1 // pred_region
      %42 = dma.done [#allocation4], 4096
    $region17: #{_matmul_padded.1} parent=1 // pred_fallthru
      _
    // Predicated region
    $region18: #{_matmul_padded.1} parent=1 // pred_check
      _
    $region19: #{_matmul_padded.1} parent=1 // pred_check_branch
      %44 = sbr.rel (0) target = $region21
    $region20: #{_matmul_padded.1} parent=1 // pred_region
      %46 = dma.done [#allocation7], 2048
    $region21: #{_matmul_padded.1} parent=1 // pred_fallthru
      _
    %p47 = scmp.eq.s32.totalorder 0, 0
    // Predicated region
    $region22: #{_matmul_padded.1} parent=1 // pred_check
      %p48 = pneg %p47
    $region23: #{_matmul_padded.1} parent=1 // pred_check_branch
      %50 = sbr.rel (%p48) target = $region25
    $region24: #{_matmul_padded.1} parent=1 // pred_region
      %51 = vst [vmem:[#allocation2] sm:$0xff] 0.0
      %52 = vst [vmem:[#allocation2 + $0x8] sm:$0xff] 0.0
      %53 = vst [vmem:[#allocation2 + $0x10] sm:$0xff] 0.0
      %54 = vst [vmem:[#allocation2 + $0x18] sm:$0xff] 0.0
      %55 = vst [vmem:[#allocation2 + $0x20] sm:$0xff] 0.0
      %56 = vst [vmem:[#allocation2 + $0x28] sm:$0xff] 0.0
      %57 = vst [vmem:[#allocation2 + $0x30] sm:$0xff] 0.0
      %58 = vst [vmem:[#allocation2 + $0x38] sm:$0xff] 0.0
      %59 = vst [vmem:[#allocation2 + $0x40] sm:$0xff] 0.0
      %60 = vst [vmem:[#allocation2 + $0x48] sm:$0xff] 0.0
      %61 = vst [vmem:[#allocation2 + $0x50] sm:$0xff] 0.0
      %62 = vst [vmem:[#allocation2 + $0x58] sm:$0xff] 0.0
      %63 = vst [vmem:[#allocation2 + $0x60] sm:$0xff] 0.0
      %64 = vst [vmem:[#allocation2 + $0x68] sm:$0xff] 0.0
      %65 = vst [vmem:[#allocation2 + $0x70] sm:$0xff] 0.0
      %66 = vst [vmem:[#allocation2 + $0x78] sm:$0xff] 0.0
      %67 = vst [vmem:[#allocation2 + $0x80] sm:$0xff] 0.0
      %68 = vst [vmem:[#allocation2 + $0x88] sm:$0xff] 0.0
      %69 = vst [vmem:[#allocation2 + $0x90] sm:$0xff] 0.0
      %70 = vst [vmem:[#allocation2 + $0x98] sm:$0xff] 0.0
      %71 = vst [vmem:[#allocation2 + $0xa0] sm:$0xff] 0.0
      %72 = vst [vmem:[#allocation2 + $0xa8] sm:$0xff] 0.0
      %73 = vst [vmem:[#allocation2 + $0xb0] sm:$0xff] 0.0
      %74 = vst [vmem:[#allocation2 + $0xb8] sm:$0xff] 0.0
      %75 = vst [vmem:[#allocation2 + $0xc0] sm:$0xff] 0.0
      %76 = vst [vmem:[#allocation2 + $0xc8] sm:$0xff] 0.0
      %77 = vst [vmem:[#allocation2 + $0xd0] sm:$0xff] 0.0
      %78 = vst [vmem:[#allocation2 + $0xd8] sm:$0xff] 0.0
      %79 = vst [vmem:[#allocation2 + $0xe0] sm:$0xff] 0.0
      %80 = vst [vmem:[#allocation2 + $0xe8] sm:$0xff] 0.0
      %81 = vst [vmem:[#allocation2 + $0xf0] sm:$0xff] 0.0
      %82 = vst [vmem:[#allocation2 + $0xf8] sm:$0xff] 0.0
    $region25: #{_matmul_padded.1} parent=1 // pred_fallthru
      _
    %v83 = vld [vmem:[#allocation2] sm:$0xff]
    %v84 = vld [vmem:[#allocation2 + $0x8] sm:$0xff]
    %v85 = vld [vmem:[#allocation2 + $0x10] sm:$0xff]
    %v86 = vld [vmem:[#allocation2 + $0x18] sm:$0xff]
    %v87 = vld [vmem:[#allocation2 + $0x20] sm:$0xff]
    %v88 = vld [vmem:[#allocation2 + $0x28] sm:$0xff]
    %v89 = vld [vmem:[#allocation2 + $0x30] sm:$0xff]
    %v90 = vld [vmem:[#allocation2 + $0x38] sm:$0xff]
    %v91 = vld [vmem:[#allocation2 + $0x40] sm:$0xff]
    %v92 = vld [vmem:[#allocation2 + $0x48] sm:$0xff]
    %v93 = vld [vmem:[#allocation2 + $0x50] sm:$0xff]
    %v94 = vld [vmem:[#allocation2 + $0x58] sm:$0xff]
    %v95 = vld [vmem:[#allocation2 + $0x60] sm:$0xff]
    %v96 = vld [vmem:[#allocation2 + $0x68] sm:$0xff]
    %v97 = vld [vmem:[#allocation2 + $0x70] sm:$0xff]
    %v98 = vld [vmem:[#allocation2 + $0x78] sm:$0xff]
    %v99 = vld [vmem:[#allocation2 + $0x80] sm:$0xff]
    %v100 = vld [vmem:[#allocation2 + $0x88] sm:$0xff]
    %v101 = vld [vmem:[#allocation2 + $0x90] sm:$0xff]
    %v102 = vld [vmem:[#allocation2 + $0x98] sm:$0xff]
    %v103 = vld [vmem:[#allocation2 + $0xa0] sm:$0xff]
    %v104 = vld [vmem:[#allocation2 + $0xa8] sm:$0xff]
    %v105 = vld [vmem:[#allocation2 + $0xb0] sm:$0xff]
    %v106 = vld [vmem:[#allocation2 + $0xb8] sm:$0xff]
    %v107 = vld [vmem:[#allocation2 + $0xc0] sm:$0xff]
    %v108 = vld [vmem:[#allocation2 + $0xc8] sm:$0xff]
    %v109 = vld [vmem:[#allocation2 + $0xd0] sm:$0xff]
    %v110 = vld [vmem:[#allocation2 + $0xd8] sm:$0xff]
    %v111 = vld [vmem:[#allocation2 + $0xe0] sm:$0xff]
    %v112 = vld [vmem:[#allocation2 + $0xe8] sm:$0xff]
    %v113 = vld [vmem:[#allocation2 + $0xf0] sm:$0xff]
    %v114 = vld [vmem:[#allocation2 + $0xf8] sm:$0xff]
    %v115 = vld [vmem:[#allocation3] sm:$0xff]
    %v116 = vld [vmem:[#allocation3 + $0x8] sm:$0xff]
    %v117 = vld [vmem:[#allocation3 + $0x10] sm:$0xff]
    %v118 = vld [vmem:[#allocation3 + $0x18] sm:$0xff]
    %v119 = vld [vmem:[#allocation3 + $0x20] sm:$0xff]
    %v120 = vld [vmem:[#allocation3 + $0x28] sm:$0xff]
    %v121 = vld [vmem:[#allocation3 + $0x30] sm:$0xff]
    %v122 = vld [vmem:[#allocation3 + $0x38] sm:$0xff]
    %v123 = vld [vmem:[#allocation3 + $0x40] sm:$0xff]
    %v124 = vld [vmem:[#allocation3 + $0x48] sm:$0xff]
    %v125 = vld [vmem:[#allocation3 + $0x50] sm:$0xff]
    %v126 = vld [vmem:[#allocation3 + $0x58] sm:$0xff]
    %v127 = vld [vmem:[#allocation3 + $0x60] sm:$0xff]
    %v128 = vld [vmem:[#allocation3 + $0x68] sm:$0xff]
    %v129 = vld [vmem:[#allocation3 + $0x70] sm:$0xff]
    %v130 = vld [vmem:[#allocation3 + $0x78] sm:$0xff]
    %v131 = vld [vmem:[#allocation3 + $0x80] sm:$0xff]
    %v132 = vld [vmem:[#allocation3 + $0x88] sm:$0xff]
    %v133 = vld [vmem:[#allocation3 + $0x90] sm:$0xff]
    %v134 = vld [vmem:[#allocation3 + $0x98] sm:$0xff]
    %v135 = vld [vmem:[#allocation3 + $0xa0] sm:$0xff]
    %v136 = vld [vmem:[#allocation3 + $0xa8] sm:$0xff]
    %v137 = vld [vmem:[#allocation3 + $0xb0] sm:$0xff]
    %v138 = vld [vmem:[#allocation3 + $0xb8] sm:$0xff]
    %v139 = vld [vmem:[#allocation3 + $0xc0] sm:$0xff]
    %v140 = vld [vmem:[#allocation3 + $0xc8] sm:$0xff]
    %v141 = vld [vmem:[#allocation3 + $0xd0] sm:$0xff]
    %v142 = vld [vmem:[#allocation3 + $0xd8] sm:$0xff]
    %v143 = vld [vmem:[#allocation3 + $0xe0] sm:$0xff]
    %v144 = vld [vmem:[#allocation3 + $0xe8] sm:$0xff]
    %v145 = vld [vmem:[#allocation3 + $0xf0] sm:$0xff]
    %v146 = vld [vmem:[#allocation3 + $0xf8] sm:$0xff]
    %v147 = vld [vmem:[#allocation6] sm:$0xf]
    %v148 = vld [vmem:[#allocation6 + $0x4] sm:$0xf]
    %v149 = vld [vmem:[#allocation6 + $0x8] sm:$0xf]
    %v150 = vld [vmem:[#allocation6 + $0xc] sm:$0xf]
    %v151 = vld [vmem:[#allocation6 + $0x10] sm:$0xf]
    %v152 = vld [vmem:[#allocation6 + $0x14] sm:$0xf]
    %v153 = vld [vmem:[#allocation6 + $0x18] sm:$0xf]
    %v154 = vld [vmem:[#allocation6 + $0x1c] sm:$0xf]
    %v155 = vld [vmem:[#allocation6 + $0x20] sm:$0xf]
    %v156 = vld [vmem:[#allocation6 + $0x24] sm:$0xf]
    %v157 = vld [vmem:[#allocation6 + $0x28] sm:$0xf]
    %v158 = vld [vmem:[#allocation6 + $0x2c] sm:$0xf]
    %v159 = vld [vmem:[#allocation6 + $0x30] sm:$0xf]
    %v160 = vld [vmem:[#allocation6 + $0x34] sm:$0xf]
    %v161 = vld [vmem:[#allocation6 + $0x38] sm:$0xf]
    %v162 = vld [vmem:[#allocation6 + $0x3c] sm:$0xf]
    %v163 = vld [vmem:[#allocation6 + $0x40] sm:$0xf]
    %v164 = vld [vmem:[#allocation6 + $0x44] sm:$0xf]
    %v165 = vld [vmem:[#allocation6 + $0x48] sm:$0xf]
    %v166 = vld [vmem:[#allocation6 + $0x4c] sm:$0xf]
    %v167 = vld [vmem:[#allocation6 + $0x50] sm:$0xf]
    %v168 = vld [vmem:[#allocation6 + $0x54] sm:$0xf]
    %v169 = vld [vmem:[#allocation6 + $0x58] sm:$0xf]
    %v170 = vld [vmem:[#allocation6 + $0x5c] sm:$0xf]
    %v171 = vld [vmem:[#allocation6 + $0x60] sm:$0xf]
    %v172 = vld [vmem:[#allocation6 + $0x64] sm:$0xf]
    %v173 = vld [vmem:[#allocation6 + $0x68] sm:$0xf]
    %v174 = vld [vmem:[#allocation6 + $0x6c] sm:$0xf]
    %v175 = vld [vmem:[#allocation6 + $0x70] sm:$0xf]
    %v176 = vld [vmem:[#allocation6 + $0x74] sm:$0xf]
    %v177 = vld [vmem:[#allocation6 + $0x78] sm:$0xf]
    %v178 = vld [vmem:[#allocation6 + $0x7c] sm:$0xf]
    %v211 = vunpack.c.l.b16 %v115
    %v212 = vunpack.c.h.b16 %v115
    %v213 = vunpack.c.l.b16 %v116
    %v214 = vunpack.c.h.b16 %v116
    %v215 = vunpack.c.l.b16 %v117
    %v216 = vunpack.c.h.b16 %v117
    %v217 = vunpack.c.l.b16 %v118
    %v218 = vunpack.c.h.b16 %v118
    %v219 = vunpack.c.l.b16 %v119
    %v220 = vunpack.c.h.b16 %v119
    %v221 = vunpack.c.l.b16 %v120
    %v222 = vunpack.c.h.b16 %v120
    %v223 = vunpack.c.l.b16 %v121
    %v224 = vunpack.c.h.b16 %v121
    %v225 = vunpack.c.l.b16 %v122
    %v226 = vunpack.c.h.b16 %v122
    %v227 = vunpack.c.l.b16 %v123
    %v228 = vunpack.c.h.b16 %v123
    %v229 = vunpack.c.l.b16 %v124
    %v230 = vunpack.c.h.b16 %v124
    %v231 = vunpack.c.l.b16 %v125
    %v232 = vunpack.c.h.b16 %v125
    %v233 = vunpack.c.l.b16 %v126
    %v234 = vunpack.c.h.b16 %v126
    %v235 = vunpack.c.l.b16 %v127
    %v236 = vunpack.c.h.b16 %v127
    %v237 = vunpack.c.l.b16 %v128
    %v238 = vunpack.c.h.b16 %v128
    %v239 = vunpack.c.l.b16 %v129
    %v240 = vunpack.c.h.b16 %v129
    %v241 = vunpack.c.l.b16 %v130
    %v242 = vunpack.c.h.b16 %v130
    %v243 = vunpack.c.l.b16 %v131
    %v244 = vunpack.c.h.b16 %v131
    %v245 = vunpack.c.l.b16 %v132
    %v246 = vunpack.c.h.b16 %v132
    %v247 = vunpack.c.l.b16 %v133
    %v248 = vunpack.c.h.b16 %v133
    %v249 = vunpack.c.l.b16 %v134
    %v250 = vunpack.c.h.b16 %v134
    %v251 = vunpack.c.l.b16 %v135
    %v252 = vunpack.c.h.b16 %v135
    %v253 = vunpack.c.l.b16 %v136
    %v254 = vunpack.c.h.b16 %v136
    %v255 = vunpack.c.l.b16 %v137
    %v256 = vunpack.c.h.b16 %v137
    %v257 = vunpack.c.l.b16 %v138
    %v258 = vunpack.c.h.b16 %v138
    %v259 = vunpack.c.l.b16 %v139
    %v260 = vunpack.c.h.b16 %v139
    %v261 = vunpack.c.l.b16 %v140
    %v262 = vunpack.c.h.b16 %v140
    %v263 = vunpack.c.l.b16 %v141
    %v264 = vunpack.c.h.b16 %v141
    %v265 = vunpack.c.l.b16 %v142
    %v266 = vunpack.c.h.b16 %v142
    %v267 = vunpack.c.l.b16 %v143
    %v268 = vunpack.c.h.b16 %v143
    %v269 = vunpack.c.l.b16 %v144
    %v270 = vunpack.c.h.b16 %v144
    %v271 = vunpack.c.l.b16 %v145
    %v272 = vunpack.c.h.b16 %v145
    %v273 = vunpack.c.l.b16 %v146
    %v274 = vunpack.c.h.b16 %v146
    %v275 = vpack.c.b16 %v213, %v211
    %v276 = vpack.c.b16 %v214, %v212
    %v277 = vpack.c.b16 %v217, %v215
    %v278 = vpack.c.b16 %v218, %v216
    %v279 = vpack.c.b16 %v221, %v219
    %v280 = vpack.c.b16 %v222, %v220
    %v281 = vpack.c.b16 %v225, %v223
    %v282 = vpack.c.b16 %v226, %v224
    %v283 = vpack.c.b16 %v229, %v227
    %v284 = vpack.c.b16 %v230, %v228
    %v285 = vpack.c.b16 %v233, %v231
    %v286 = vpack.c.b16 %v234, %v232
    %v287 = vpack.c.b16 %v237, %v235
    %v288 = vpack.c.b16 %v238, %v236
    %v289 = vpack.c.b16 %v241, %v239
    %v290 = vpack.c.b16 %v242, %v240
    %v291 = vpack.c.b16 %v245, %v243
    %v292 = vpack.c.b16 %v246, %v244
    %v293 = vpack.c.b16 %v249, %v247
    %v294 = vpack.c.b16 %v250, %v248
    %v295 = vpack.c.b16 %v253, %v251
    %v296 = vpack.c.b16 %v254, %v252
    %v297 = vpack.c.b16 %v257, %v255
    %v298 = vpack.c.b16 %v258, %v256
    %v299 = vpack.c.b16 %v261, %v259
    %v300 = vpack.c.b16 %v262, %v260
    %v301 = vpack.c.b16 %v265, %v263
    %v302 = vpack.c.b16 %v266, %v264
    %v303 = vpack.c.b16 %v269, %v267
    %v304 = vpack.c.b16 %v270, %v268
    %v305 = vpack.c.b16 %v273, %v271
    %v306 = vpack.c.b16 %v274, %v272
    %v371 = vunpack.c.l.b16 %v147
    %v372 = vunpack.c.l.b16 %v148
    %v373 = vunpack.c.l.b16 %v149
    %v374 = vunpack.c.l.b16 %v150
    %v375 = vunpack.c.l.b16 %v151
    %v376 = vunpack.c.l.b16 %v152
    %v377 = vunpack.c.l.b16 %v153
    %v378 = vunpack.c.l.b16 %v154
    %v379 = vunpack.c.l.b16 %v155
    %v380 = vunpack.c.l.b16 %v156
    %v381 = vunpack.c.l.b16 %v157
    %v382 = vunpack.c.l.b16 %v158
    %v383 = vunpack.c.l.b16 %v159
    %v384 = vunpack.c.l.b16 %v160
    %v385 = vunpack.c.l.b16 %v161
    %v386 = vunpack.c.l.b16 %v162
    %v387 = vunpack.c.l.b16 %v163
    %v388 = vunpack.c.l.b16 %v164
    %v389 = vunpack.c.l.b16 %v165
    %v390 = vunpack.c.l.b16 %v166
    %v391 = vunpack.c.l.b16 %v167
    %v392 = vunpack.c.l.b16 %v168
    %v393 = vunpack.c.l.b16 %v169
    %v394 = vunpack.c.l.b16 %v170
    %v395 = vunpack.c.l.b16 %v171
    %v396 = vunpack.c.l.b16 %v172
    %v397 = vunpack.c.l.b16 %v173
    %v398 = vunpack.c.l.b16 %v174
    %v399 = vunpack.c.l.b16 %v175
    %v400 = vunpack.c.l.b16 %v176
    %v401 = vunpack.c.l.b16 %v177
    %v402 = vunpack.c.l.b16 %v178
    %v403 = vpack.c.b16 %v372, %v371
    %v404 = vpack.c.b16 %v374, %v373
    %v405 = vpack.c.b16 %v376, %v375
    %v406 = vpack.c.b16 %v378, %v377
    %v407 = vpack.c.b16 %v380, %v379
    %v408 = vpack.c.b16 %v382, %v381
    %v409 = vpack.c.b16 %v384, %v383
    %v410 = vpack.c.b16 %v386, %v385
    %v411 = vpack.c.b16 %v388, %v387
    %v412 = vpack.c.b16 %v390, %v389
    %v413 = vpack.c.b16 %v392, %v391
    %v414 = vpack.c.b16 %v394, %v393
    %v415 = vpack.c.b16 %v396, %v395
    %v416 = vpack.c.b16 %v398, %v397
    %v417 = vpack.c.b16 %v400, %v399
    %v418 = vpack.c.b16 %v402, %v401
    %435 = vmatpush.bf16.msra.mxu0 %v410
    %436 = vmatpush.bf16.msra.mxu0 %v409
    %437 = vmatpush.bf16.msra.mxu0 %v408
    %438 = vmatpush.bf16.msra.mxu0 %v407
    %439 = vmatpush.bf16.msra.mxu0 %v406
    %440 = vmatpush.bf16.msra.mxu0 %v405
    %441 = vmatpush.bf16.msra.mxu0 %v404
    %442 = vmatpush.bf16.msra.mxu0 %v403
    %443 = vmatmul.bf16.gmra.mxu0 %v275
    %v444 = vpop.f32.mrf.mxu0
    %v445 = vadd.f32 0.0, %v444
    %v446 = vpop.f32.mrf.mxu0
    %v447 = vadd.f32 0.0, %v446
    %448 = vmatmul.bf16.gmra.mxu0 %v277
    %v449 = vpop.f32.mrf.mxu0
    %v450 = vadd.f32 0.0, %v449
    %v451 = vpop.f32.mrf.mxu0
    %v452 = vadd.f32 0.0, %v451
    %453 = vmatmul.bf16.gmra.mxu0 %v279
    %v454 = vpop.f32.mrf.mxu0
    %v455 = vadd.f32 0.0, %v454
    %v456 = vpop.f32.mrf.mxu0
    %v457 = vadd.f32 0.0, %v456
    %458 = vmatmul.bf16.gmra.mxu0 %v281
    %v459 = vpop.f32.mrf.mxu0
    %v460 = vadd.f32 0.0, %v459
    %v461 = vpop.f32.mrf.mxu0
    %v462 = vadd.f32 0.0, %v461
    %463 = vmatmul.bf16.gmra.mxu0 %v283
    %v464 = vpop.f32.mrf.mxu0
    %v465 = vadd.f32 0.0, %v464
    %v466 = vpop.f32.mrf.mxu0
    %v467 = vadd.f32 0.0, %v466
    %468 = vmatmul.bf16.gmra.mxu0 %v285
    %v469 = vpop.f32.mrf.mxu0
    %v470 = vadd.f32 0.0, %v469
    %v471 = vpop.f32.mrf.mxu0
    %v472 = vadd.f32 0.0, %v471
    %473 = vmatmul.bf16.gmra.mxu0 %v287
    %v474 = vpop.f32.mrf.mxu0
    %v475 = vadd.f32 0.0, %v474
    %v476 = vpop.f32.mrf.mxu0
    %v477 = vadd.f32 0.0, %v476
    %478 = vmatmul.bf16.gmra.mxu0 %v289
    %v479 = vpop.f32.mrf.mxu0
    %v480 = vadd.f32 0.0, %v479
    %v481 = vpop.f32.mrf.mxu0
    %v482 = vadd.f32 0.0, %v481
    %483 = vmatmul.bf16.gmra.mxu0 %v291
    %v484 = vpop.f32.mrf.mxu0
    %v485 = vadd.f32 0.0, %v484
    %v486 = vpop.f32.mrf.mxu0
    %v487 = vadd.f32 0.0, %v486
    %488 = vmatmul.bf16.gmra.mxu0 %v293
    %v489 = vpop.f32.mrf.mxu0
    %v490 = vadd.f32 0.0, %v489
    %v491 = vpop.f32.mrf.mxu0
    %v492 = vadd.f32 0.0, %v491
    %493 = vmatmul.bf16.gmra.mxu0 %v295
    %v494 = vpop.f32.mrf.mxu0
    %v495 = vadd.f32 0.0, %v494
    %v496 = vpop.f32.mrf.mxu0
    %v497 = vadd.f32 0.0, %v496
    %498 = vmatmul.bf16.gmra.mxu0 %v297
    %v499 = vpop.f32.mrf.mxu0
    %v500 = vadd.f32 0.0, %v499
    %v501 = vpop.f32.mrf.mxu0
    %v502 = vadd.f32 0.0, %v501
    %503 = vmatmul.bf16.gmra.mxu0 %v299
    %v504 = vpop.f32.mrf.mxu0
    %v505 = vadd.f32 0.0, %v504
    %v506 = vpop.f32.mrf.mxu0
    %v507 = vadd.f32 0.0, %v506
    %508 = vmatmul.bf16.gmra.mxu0 %v301
    %v509 = vpop.f32.mrf.mxu0
    %v510 = vadd.f32 0.0, %v509
    %v511 = vpop.f32.mrf.mxu0
    %v512 = vadd.f32 0.0, %v511
    %513 = vmatmul.bf16.gmra.mxu0 %v303
    %v514 = vpop.f32.mrf.mxu0
    %v515 = vadd.f32 0.0, %v514
    %v516 = vpop.f32.mrf.mxu0
    %v517 = vadd.f32 0.0, %v516
    %518 = vmatmul.bf16.gmra.mxu0 %v305
    %v519 = vpop.f32.mrf.mxu0
    %v520 = vadd.f32 0.0, %v519
    %v521 = vpop.f32.mrf.mxu0
    %v522 = vadd.f32 0.0, %v521
    %523 = vdwg.mxu0
    %524 = vmatpush.bf16.msra.mxu0 %v418
    %525 = vmatpush.bf16.msra.mxu0 %v417
    %526 = vmatpush.bf16.msra.mxu0 %v416
    %527 = vmatpush.bf16.msra.mxu0 %v415
    %528 = vmatpush.bf16.msra.mxu0 %v414
    %529 = vmatpush.bf16.msra.mxu0 %v413
    %530 = vmatpush.bf16.msra.mxu0 %v412
    %531 = vmatpush.bf16.msra.mxu0 %v411
    %532 = vmatmul.bf16.gmra.mxu0 %v276
    %v533 = vpop.f32.mrf.mxu0
    %v534 = vadd.f32 %v445, %v533
    %v535 = vpop.f32.mrf.mxu0
    %v536 = vadd.f32 %v447, %v535
    %537 = vmatmul.bf16.gmra.mxu0 %v278
    %v538 = vpop.f32.mrf.mxu0
    %v539 = vadd.f32 %v450, %v538
    %v540 = vpop.f32.mrf.mxu0
    %v541 = vadd.f32 %v452, %v540
    %542 = vmatmul.bf16.gmra.mxu0 %v280
    %v543 = vpop.f32.mrf.mxu0
    %v544 = vadd.f32 %v455, %v543
    %v545 = vpop.f32.mrf.mxu0
    %v546 = vadd.f32 %v457, %v545
    %547 = vmatmul.bf16.gmra.mxu0 %v282
    %v548 = vpop.f32.mrf.mxu0
    %v549 = vadd.f32 %v460, %v548
    %v550 = vpop.f32.mrf.mxu0
    %v551 = vadd.f32 %v462, %v550
    %552 = vmatmul.bf16.gmra.mxu0 %v284
    %v553 = vpop.f32.mrf.mxu0
    %v554 = vadd.f32 %v465, %v553
    %v555 = vpop.f32.mrf.mxu0
    %v556 = vadd.f32 %v467, %v555
    %557 = vmatmul.bf16.gmra.mxu0 %v286
    %v558 = vpop.f32.mrf.mxu0
    %v559 = vadd.f32 %v470, %v558
    %v560 = vpop.f32.mrf.mxu0
    %v561 = vadd.f32 %v472, %v560
    %562 = vmatmul.bf16.gmra.mxu0 %v288
    %v563 = vpop.f32.mrf.mxu0
    %v564 = vadd.f32 %v475, %v563
    %v565 = vpop.f32.mrf.mxu0
    %v566 = vadd.f32 %v477, %v565
    %567 = vmatmul.bf16.gmra.mxu0 %v290
    %v568 = vpop.f32.mrf.mxu0
    %v569 = vadd.f32 %v480, %v568
    %v570 = vpop.f32.mrf.mxu0
    %v571 = vadd.f32 %v482, %v570
    %572 = vmatmul.bf16.gmra.mxu0 %v292
    %v573 = vpop.f32.mrf.mxu0
    %v574 = vadd.f32 %v485, %v573
    %v575 = vpop.f32.mrf.mxu0
    %v576 = vadd.f32 %v487, %v575
    %577 = vmatmul.bf16.gmra.mxu0 %v294
    %v578 = vpop.f32.mrf.mxu0
    %v579 = vadd.f32 %v490, %v578
    %v580 = vpop.f32.mrf.mxu0
    %v581 = vadd.f32 %v492, %v580
    %582 = vmatmul.bf16.gmra.mxu0 %v296
    %v583 = vpop.f32.mrf.mxu0
    %v584 = vadd.f32 %v495, %v583
    %v585 = vpop.f32.mrf.mxu0
    %v586 = vadd.f32 %v497, %v585
    %587 = vmatmul.bf16.gmra.mxu0 %v298
    %v588 = vpop.f32.mrf.mxu0
    %v589 = vadd.f32 %v500, %v588
    %v590 = vpop.f32.mrf.mxu0
    %v591 = vadd.f32 %v502, %v590
    %592 = vmatmul.bf16.gmra.mxu0 %v300
    %v593 = vpop.f32.mrf.mxu0
    %v594 = vadd.f32 %v505, %v593
    %v595 = vpop.f32.mrf.mxu0
    %v596 = vadd.f32 %v507, %v595
    %597 = vmatmul.bf16.gmra.mxu0 %v302
    %v598 = vpop.f32.mrf.mxu0
    %v599 = vadd.f32 %v510, %v598
    %v600 = vpop.f32.mrf.mxu0
    %v601 = vadd.f32 %v512, %v600
    %602 = vmatmul.bf16.gmra.mxu0 %v304
    %v603 = vpop.f32.mrf.mxu0
    %v604 = vadd.f32 %v515, %v603
    %v605 = vpop.f32.mrf.mxu0
    %v606 = vadd.f32 %v517, %v605
    %607 = vmatmul.bf16.gmra.mxu0 %v306
    %v608 = vpop.f32.mrf.mxu0
    %v609 = vadd.f32 %v520, %v608
    %v610 = vpop.f32.mrf.mxu0
    %v611 = vadd.f32 %v522, %v610
    %612 = vdwg.mxu0
    %v613 = vadd.f32 %v83, %v534
    %v614 = vadd.f32 %v84, %v536
    %v615 = vadd.f32 %v85, %v539
    %v616 = vadd.f32 %v86, %v541
    %v617 = vadd.f32 %v87, %v544
    %v618 = vadd.f32 %v88, %v546
    %v619 = vadd.f32 %v89, %v549
    %v620 = vadd.f32 %v90, %v551
    %v621 = vadd.f32 %v91, %v554
    %v622 = vadd.f32 %v92, %v556
    %v623 = vadd.f32 %v93, %v559
    %v624 = vadd.f32 %v94, %v561
    %v625 = vadd.f32 %v95, %v564
    %v626 = vadd.f32 %v96, %v566
    %v627 = vadd.f32 %v97, %v569
    %v628 = vadd.f32 %v98, %v571
    %v629 = vadd.f32 %v99, %v574
    %v630 = vadd.f32 %v100, %v576
    %v631 = vadd.f32 %v101, %v579
    %v632 = vadd.f32 %v102, %v581
    %v633 = vadd.f32 %v103, %v584
    %v634 = vadd.f32 %v104, %v586
    %v635 = vadd.f32 %v105, %v589
    %v636 = vadd.f32 %v106, %v591
    %v637 = vadd.f32 %v107, %v594
    %v638 = vadd.f32 %v108, %v596
    %v639 = vadd.f32 %v109, %v599
    %v640 = vadd.f32 %v110, %v601
    %v641 = vadd.f32 %v111, %v604
    %v642 = vadd.f32 %v112, %v606
    %v643 = vadd.f32 %v113, %v609
    %v644 = vadd.f32 %v114, %v611
    %645 = vst [vmem:[#allocation2] sm:$0xff] %v613
    %646 = vst [vmem:[#allocation2 + $0x8] sm:$0xff] %v614
    %647 = vst [vmem:[#allocation2 + $0x10] sm:$0xff] %v615
    %648 = vst [vmem:[#allocation2 + $0x18] sm:$0xff] %v616
    %649 = vst [vmem:[#allocation2 + $0x20] sm:$0xff] %v617
    %650 = vst [vmem:[#allocation2 + $0x28] sm:$0xff] %v618
    %651 = vst [vmem:[#allocation2 + $0x30] sm:$0xff] %v619
    %652 = vst [vmem:[#allocation2 + $0x38] sm:$0xff] %v620
    %653 = vst [vmem:[#allocation2 + $0x40] sm:$0xff] %v621
    %654 = vst [vmem:[#allocation2 + $0x48] sm:$0xff] %v622
    %655 = vst [vmem:[#allocation2 + $0x50] sm:$0xff] %v623
    %656 = vst [vmem:[#allocation2 + $0x58] sm:$0xff] %v624
    %657 = vst [vmem:[#allocation2 + $0x60] sm:$0xff] %v625
    %658 = vst [vmem:[#allocation2 + $0x68] sm:$0xff] %v626
    %659 = vst [vmem:[#allocation2 + $0x70] sm:$0xff] %v627
    %660 = vst [vmem:[#allocation2 + $0x78] sm:$0xff] %v628
    %661 = vst [vmem:[#allocation2 + $0x80] sm:$0xff] %v629
    %662 = vst [vmem:[#allocation2 + $0x88] sm:$0xff] %v630
    %663 = vst [vmem:[#allocation2 + $0x90] sm:$0xff] %v631
    %664 = vst [vmem:[#allocation2 + $0x98] sm:$0xff] %v632
    %665 = vst [vmem:[#allocation2 + $0xa0] sm:$0xff] %v633
    %666 = vst [vmem:[#allocation2 + $0xa8] sm:$0xff] %v634
    %667 = vst [vmem:[#allocation2 + $0xb0] sm:$0xff] %v635
    %668 = vst [vmem:[#allocation2 + $0xb8] sm:$0xff] %v636
    %669 = vst [vmem:[#allocation2 + $0xc0] sm:$0xff] %v637
    %670 = vst [vmem:[#allocation2 + $0xc8] sm:$0xff] %v638
    %671 = vst [vmem:[#allocation2 + $0xd0] sm:$0xff] %v639
    %672 = vst [vmem:[#allocation2 + $0xd8] sm:$0xff] %v640
    %673 = vst [vmem:[#allocation2 + $0xe0] sm:$0xff] %v641
    %674 = vst [vmem:[#allocation2 + $0xe8] sm:$0xff] %v642
    %675 = vst [vmem:[#allocation2 + $0xf0] sm:$0xff] %v643
    %676 = vst [vmem:[#allocation2 + $0xf8] sm:$0xff] %v644
    // Predicated region
    $region26: #{_matmul_padded.1} parent=1 // pred_check
      %p677 = pneg %p47
    $region27: #{_matmul_padded.1} parent=1 // pred_check_branch
      %679 = sbr.rel (%p677) target = $region29
    $region28: #{_matmul_padded.1} parent=1 // pred_region
      %v680 = vld [vmem:[#allocation2] sm:$0xff]
      %v681 = vld [vmem:[#allocation2 + $0x8] sm:$0xff]
      %v682 = vld [vmem:[#allocation2 + $0x10] sm:$0xff]
      %v683 = vld [vmem:[#allocation2 + $0x18] sm:$0xff]
      %v684 = vld [vmem:[#allocation2 + $0x20] sm:$0xff]
      %v685 = vld [vmem:[#allocation2 + $0x28] sm:$0xff]
      %v686 = vld [vmem:[#allocation2 + $0x30] sm:$0xff]
      %v687 = vld [vmem:[#allocation2 + $0x38] sm:$0xff]
      %v688 = vld [vmem:[#allocation2 + $0x40] sm:$0xff]
      %v689 = vld [vmem:[#allocation2 + $0x48] sm:$0xff]
      %v690 = vld [vmem:[#allocation2 + $0x50] sm:$0xff]
      %v691 = vld [vmem:[#allocation2 + $0x58] sm:$0xff]
      %v692 = vld [vmem:[#allocation2 + $0x60] sm:$0xff]
      %v693 = vld [vmem:[#allocation2 + $0x68] sm:$0xff]
      %v694 = vld [vmem:[#allocation2 + $0x70] sm:$0xff]
      %v695 = vld [vmem:[#allocation2 + $0x78] sm:$0xff]
      %v696 = vld [vmem:[#allocation2 + $0x80] sm:$0xff]
      %v697 = vld [vmem:[#allocation2 + $0x88] sm:$0xff]
      %v698 = vld [vmem:[#allocation2 + $0x90] sm:$0xff]
      %v699 = vld [vmem:[#allocation2 + $0x98] sm:$0xff]
      %v700 = vld [vmem:[#allocation2 + $0xa0] sm:$0xff]
      %v701 = vld [vmem:[#allocation2 + $0xa8] sm:$0xff]
      %v702 = vld [vmem:[#allocation2 + $0xb0] sm:$0xff]
      %v703 = vld [vmem:[#allocation2 + $0xb8] sm:$0xff]
      %v704 = vld [vmem:[#allocation2 + $0xc0] sm:$0xff]
      %v705 = vld [vmem:[#allocation2 + $0xc8] sm:$0xff]
      %v706 = vld [vmem:[#allocation2 + $0xd0] sm:$0xff]
      %v707 = vld [vmem:[#allocation2 + $0xd8] sm:$0xff]
      %v708 = vld [vmem:[#allocation2 + $0xe0] sm:$0xff]
      %v709 = vld [vmem:[#allocation2 + $0xe8] sm:$0xff]
      %v710 = vld [vmem:[#allocation2 + $0xf0] sm:$0xff]
      %v711 = vld [vmem:[#allocation2 + $0xf8] sm:$0xff]
      %v712 = vld [vmem:[%s2] sm:$0x1]
      %v714 = vperm.slane %v712, 0
      %v716 = vadd.f32 %v680, %v714
      %v717 = vadd.f32 %v681, %v714
      %v718 = vadd.f32 %v682, %v714
      %v719 = vadd.f32 %v683, %v714
      %v720 = vadd.f32 %v684, %v714
      %v721 = vadd.f32 %v685, %v714
      %v722 = vadd.f32 %v686, %v714
      %v723 = vadd.f32 %v687, %v714
      %v724 = vadd.f32 %v688, %v714
      %v725 = vadd.f32 %v689, %v714
      %v726 = vadd.f32 %v690, %v714
      %v727 = vadd.f32 %v691, %v714
      %v728 = vadd.f32 %v692, %v714
      %v729 = vadd.f32 %v693, %v714
      %v730 = vadd.f32 %v694, %v714
      %v731 = vadd.f32 %v695, %v714
      %v732 = vadd.f32 %v696, %v714
      %v733 = vadd.f32 %v697, %v714
      %v734 = vadd.f32 %v698, %v714
      %v735 = vadd.f32 %v699, %v714
      %v736 = vadd.f32 %v700, %v714
      %v737 = vadd.f32 %v701, %v714
      %v738 = vadd.f32 %v702, %v714
      %v739 = vadd.f32 %v703, %v714
      %v740 = vadd.f32 %v704, %v714
      %v741 = vadd.f32 %v705, %v714
      %v742 = vadd.f32 %v706, %v714
      %v743 = vadd.f32 %v707, %v714
      %v744 = vadd.f32 %v708, %v714
      %v745 = vadd.f32 %v709, %v714
      %v746 = vadd.f32 %v710, %v714
      %v747 = vadd.f32 %v711, %v714
      %v748 = vmax.f32 %v716, 0.0
      %v749 = vmax.f32 %v717, 0.0
      %v750 = vmax.f32 %v718, 0.0
      %v751 = vmax.f32 %v719, 0.0
      %v752 = vmax.f32 %v720, 0.0
      %v753 = vmax.f32 %v721, 0.0
      %v754 = vmax.f32 %v722, 0.0
      %v755 = vmax.f32 %v723, 0.0
      %v756 = vmax.f32 %v724, 0.0
      %v757 = vmax.f32 %v725, 0.0
      %v758 = vmax.f32 %v726, 0.0
      %v759 = vmax.f32 %v727, 0.0
      %v760 = vmax.f32 %v728, 0.0
      %v761 = vmax.f32 %v729, 0.0
      %v762 = vmax.f32 %v730, 0.0
      %v763 = vmax.f32 %v731, 0.0
      %v764 = vmax.f32 %v732, 0.0
      %v765 = vmax.f32 %v733, 0.0
      %v766 = vmax.f32 %v734, 0.0
      %v767 = vmax.f32 %v735, 0.0
      %v768 = vmax.f32 %v736, 0.0
      %v769 = vmax.f32 %v737, 0.0
      %v770 = vmax.f32 %v738, 0.0
      %v771 = vmax.f32 %v739, 0.0
      %v772 = vmax.f32 %v740, 0.0
      %v773 = vmax.f32 %v741, 0.0
      %v774 = vmax.f32 %v742, 0.0
      %v775 = vmax.f32 %v743, 0.0
      %v776 = vmax.f32 %v744, 0.0
      %v777 = vmax.f32 %v745, 0.0
      %v778 = vmax.f32 %v746, 0.0
      %v779 = vmax.f32 %v747, 0.0
      %v780 = vpack.c.bf16 %v748, %v748
      %v781 = vpack.c.bf16 %v749, %v749
      %v782 = vpack.c.bf16 %v750, %v750
      %v783 = vpack.c.bf16 %v751, %v751
      %v784 = vpack.c.bf16 %v752, %v752
      %v785 = vpack.c.bf16 %v753, %v753
      %v786 = vpack.c.bf16 %v754, %v754
      %v787 = vpack.c.bf16 %v755, %v755
      %v788 = vpack.c.bf16 %v756, %v756
      %v789 = vpack.c.bf16 %v757, %v757
      %v790 = vpack.c.bf16 %v758, %v758
      %v791 = vpack.c.bf16 %v759, %v759
      %v792 = vpack.c.bf16 %v760, %v760
      %v793 = vpack.c.bf16 %v761, %v761
      %v794 = vpack.c.bf16 %v762, %v762
      %v795 = vpack.c.bf16 %v763, %v763
      %v796 = vpack.c.bf16 %v764, %v764
      %v797 = vpack.c.bf16 %v765, %v765
      %v798 = vpack.c.bf16 %v766, %v766
      %v799 = vpack.c.bf16 %v767, %v767
      %v800 = vpack.c.bf16 %v768, %v768
      %v801 = vpack.c.bf16 %v769, %v769
      %v802 = vpack.c.bf16 %v770, %v770
      %v803 = vpack.c.bf16 %v771, %v771
      %v804 = vpack.c.bf16 %v772, %v772
      %v805 = vpack.c.bf16 %v773, %v773
      %v806 = vpack.c.bf16 %v774, %v774
      %v807 = vpack.c.bf16 %v775, %v775
      %v808 = vpack.c.bf16 %v776, %v776
      %v809 = vpack.c.bf16 %v777, %v777
      %v810 = vpack.c.bf16 %v778, %v778
      %v811 = vpack.c.bf16 %v779, %v779
      %812 = vst [vmem:[#allocation8] sm:$0xf] %v780
      %813 = vst [vmem:[#allocation8 + $0x4] sm:$0xf] %v781
      %814 = vst [vmem:[#allocation8 + $0x8] sm:$0xf] %v782
      %815 = vst [vmem:[#allocation8 + $0xc] sm:$0xf] %v783
      %816 = vst [vmem:[#allocation8 + $0x10] sm:$0xf] %v784
      %817 = vst [vmem:[#allocation8 + $0x14] sm:$0xf] %v785
      %818 = vst [vmem:[#allocation8 + $0x18] sm:$0xf] %v786
      %819 = vst [vmem:[#allocation8 + $0x1c] sm:$0xf] %v787
      %820 = vst [vmem:[#allocation8 + $0x20] sm:$0xf] %v788
      %821 = vst [vmem:[#allocation8 + $0x24] sm:$0xf] %v789
      %822 = vst [vmem:[#allocation8 + $0x28] sm:$0xf] %v790
      %823 = vst [vmem:[#allocation8 + $0x2c] sm:$0xf] %v791
      %824 = vst [vmem:[#allocation8 + $0x30] sm:$0xf] %v792
      %825 = vst [vmem:[#allocation8 + $0x34] sm:$0xf] %v793
      %826 = vst [vmem:[#allocation8 + $0x38] sm:$0xf] %v794
      %827 = vst [vmem:[#allocation8 + $0x3c] sm:$0xf] %v795
      %828 = vst [vmem:[#allocation8 + $0x40] sm:$0xf] %v796
      %829 = vst [vmem:[#allocation8 + $0x44] sm:$0xf] %v797
      %830 = vst [vmem:[#allocation8 + $0x48] sm:$0xf] %v798
      %831 = vst [vmem:[#allocation8 + $0x4c] sm:$0xf] %v799
      %832 = vst [vmem:[#allocation8 + $0x50] sm:$0xf] %v800
      %833 = vst [vmem:[#allocation8 + $0x54] sm:$0xf] %v801
      %834 = vst [vmem:[#allocation8 + $0x58] sm:$0xf] %v802
      %835 = vst [vmem:[#allocation8 + $0x5c] sm:$0xf] %v803
      %836 = vst [vmem:[#allocation8 + $0x60] sm:$0xf] %v804
      %837 = vst [vmem:[#allocation8 + $0x64] sm:$0xf] %v805
      %838 = vst [vmem:[#allocation8 + $0x68] sm:$0xf] %v806
      %839 = vst [vmem:[#allocation8 + $0x6c] sm:$0xf] %v807
      %840 = vst [vmem:[#allocation8 + $0x70] sm:$0xf] %v808
      %841 = vst [vmem:[#allocation8 + $0x74] sm:$0xf] %v809
      %842 = vst [vmem:[#allocation8 + $0x78] sm:$0xf] %v810
      %843 = vst [vmem:[#allocation8 + $0x7c] sm:$0xf] %v811
    $region29: #{_matmul_padded.1} parent=1 // pred_fallthru
      _
    // Predicated region
    $region30: #{_matmul_padded.1} parent=1 // pred_check
      _
    $region31: #{_matmul_padded.1} parent=1 // pred_check_branch
      %845 = sbr.rel (0) target = $region33
    $region32: #{_matmul_padded.1} parent=1 // pred_region
      %847 = vsyncadd [#allocation5], 0
      %s848 = sshll.u32 [#allocation8], 4
      %s849 = int_to_ptr.vmem [resolvable:$true] %s848
      %s850 = sshll.u32 %s3, 4
      %s851 = int_to_ptr.hbm [resolvable:$true] %s850
      %856 = dma.vmem_to_hbm [thread:$0]  %s849, 2048, %s851, [#allocation5], 64, 64, 4
    $region33: #{_matmul_padded.1} parent=1 // pred_fallthru
      _
    // Predicated region
    $region34: #{_matmul_padded.1} parent=1 // pred_check
      _
    $region35: #{_matmul_padded.1} parent=1 // pred_check_branch
      %858 = sbr.rel (0) target = $region37
    $region36: #{_matmul_padded.1} parent=1 // pred_region
      %860 = dma.done [#allocation5], 2048
    $region37: #{_matmul_padded.1} parent=1 // pred_fallthru
      _
    %861 = vsyncpa [#allocation4], 1
    %862 = vsyncpa [#allocation7], 1
    %863 = vsyncpa [#allocation5], 1

</llo_original>
